<compile_context>
chip_gen: v7x
topology: tpu7x:2x2x1
jax: 0.10.0
libtpu: 0.0.40
codegen_flags: <defaults>
</compile_context>

<pallas_src>
import functools

import jax
import jax.numpy as jnp
import numpy as np
from jax import lax
from jax.experimental import pallas as pl
from jax.experimental.pallas import tpu as pltpu

MODALITY_SEP = "___"
_LANE = 128
_SUBLANE_BF16 = 16            # bf16 packs 16 rows per (sublane, lane) tile
_TILE_ROWS_TARGET = 256       # feeds the 256x256 MXU on v6e/v7x
_VMEM_LIMIT_BYTES = 48 * 1024 * 1024


def _round_up(n, m):
    return ((n + m - 1) // m) * m


def _pad2(a, rows, cols):
    r, c = a.shape
    return jnp.pad(a, ((0, rows - r), (0, cols - c)))


# ----------------------------------------------------------------------------
# Pallas kernels
# ----------------------------------------------------------------------------
def _encoder_kernel(x_ref, w1_ref, b1_ref, w2_ref, b2_ref, w3_ref, b3_ref,
                    lat_ref, *, l2_norm):
    """One grid step = (modality, row_tile): 3-layer MLP encoder.

    bf16 operands on the MXU, f32 accumulation; bias/ReLU/normalize in f32.
    """
    x = x_ref[0]                                               # (T, IN_P) bf16
    h1 = jnp.maximum(
        jnp.dot(x, w1_ref[0], preferred_element_type=jnp.float32) + b1_ref[0],
        0.0)
    h2 = jnp.maximum(
        jnp.dot(h1.astype(jnp.bfloat16), w2_ref[0],
                preferred_element_type=jnp.float32) + b2_ref[0], 0.0)
    y = jnp.dot(h2.astype(jnp.bfloat16), w3_ref[0],
                preferred_element_type=jnp.float32) + b3_ref[0]
    if l2_norm:
        # torch F.normalize (dim=1): x / max(||x||_2, 1e-12).  Padded latent
        # columns are exactly zero (zero weight cols / zero bias), so the norm
        # is unaffected.  rsqrt(max(n^2, eps^2)) == 1/max(n, eps); EUP slot.
        nsq = jnp.sum(y * y, axis=1, keepdims=True)
        y = y * lax.rsqrt(jnp.maximum(nsq, 1e-24))
    lat_ref[0] = y.astype(lat_ref.dtype)


def _decoder_kernel(lat_ref, w1_ref, b1_ref, w2_ref, b2_ref, w3_ref, b3_ref,
                    out_ref):
    """One grid step = (decoder modality, encoder modality, row_tile)."""
    z = lat_ref[0]                                             # (T, LAT_P) bf16
    h1 = jnp.maximum(
        jnp.dot(z, w1_ref[0], preferred_element_type=jnp.float32) + b1_ref[0],
        0.0)
    h2 = jnp.maximum(
        jnp.dot(h1.astype(jnp.bfloat16), w2_ref[0],
                preferred_element_type=jnp.float32) + b2_ref[0], 0.0)
    y = jnp.dot(h2.astype(jnp.bfloat16), w3_ref[0],
                preferred_element_type=jnp.float32) + b3_ref[0]
    out_ref[0, 0] = y.astype(out_ref.dtype)


# ----------------------------------------------------------------------------
# pallas_call wrappers
# ----------------------------------------------------------------------------
def _run_encoders(x_stacked, enc_w, *, l2_norm, tile_rows, latent_pad):
    num_mod, bp, in_pad = x_stacked.shape
    num_tiles = bp // tile_rows
    h1p = enc_w[0].shape[-1]
    h2p = enc_w[2].shape[-1]
    flops = 2 * num_mod * bp * (in_pad * h1p + h1p * h2p + h2p * latent_pad)
    bytes_accessed = int(
        x_stacked.size * x_stacked.dtype.itemsize
        + sum(int(np.prod(w.shape)) * w.dtype.itemsize for w in enc_w)
        + num_mod * bp * latent_pad * 2)

    def w_spec(shape):
        # Weights depend only on the modality axis -> resident across row tiles.
        return pl.BlockSpec((1,) + tuple(shape[1:]), lambda m, r: (m, 0, 0))

    in_specs = [pl.BlockSpec((1, tile_rows, in_pad), lambda m, r: (m, r, 0))]
    in_specs += [w_spec(w.shape) for w in enc_w]
    return pl.pallas_call(
        functools.partial(_encoder_kernel, l2_norm=l2_norm),
        out_shape=jax.ShapeDtypeStruct((num_mod, bp, latent_pad),
                                       jnp.bfloat16),
        grid=(num_mod, num_tiles),
        in_specs=in_specs,
        out_specs=pl.BlockSpec((1, tile_rows, latent_pad),
                               lambda m, r: (m, r, 0)),
        compiler_params=pltpu.CompilerParams(
            dimension_semantics=("parallel", "parallel"),
            vmem_limit_bytes=_VMEM_LIMIT_BYTES),
        cost_estimate=pl.CostEstimate(
            flops=flops, transcendentals=num_mod * bp,
            bytes_accessed=bytes_accessed),
    )(x_stacked, *enc_w)


def _run_decoders(lat_stacked, dec_w, *, tile_rows, out_pad):
    num_mod, bp, lat_pad = lat_stacked.shape
    num_tiles = bp // tile_rows
    h2p = dec_w[0].shape[-1]
    h1p = dec_w[2].shape[-1]
    rows_total = num_mod * bp
    flops = 2 * num_mod * rows_total * (lat_pad * h2p + h2p * h1p
                                        + h1p * out_pad)
    bytes_accessed = int(
        num_mod * lat_stacked.size * lat_stacked.dtype.itemsize
        + sum(int(np.prod(w.shape)) * w.dtype.itemsize for w in dec_w)
        + num_mod * rows_total * out_pad * 4)

    def w_spec(shape):
        # Decoder weights depend only on the decoder axis -> resident across
        # (encoder modality, row tile).
        return pl.BlockSpec((1,) + tuple(shape[1:]),
                            lambda m, e, r: (m, 0, 0))

    in_specs = [pl.BlockSpec((1, tile_rows, lat_pad),
                             lambda m, e, r: (e, r, 0))]
    in_specs += [w_spec(w.shape) for w in dec_w]
    return pl.pallas_call(
        _decoder_kernel,
        out_shape=jax.ShapeDtypeStruct((num_mod, num_mod, bp, out_pad),
                                       jnp.float32),
        grid=(num_mod, num_mod, num_tiles),
        in_specs=in_specs,
        out_specs=pl.BlockSpec((1, 1, tile_rows, out_pad),
                               lambda m, e, r: (m, e, r, 0)),
        compiler_params=pltpu.CompilerParams(
            dimension_semantics=("parallel", "parallel", "parallel"),
            vmem_limit_bytes=_VMEM_LIMIT_BYTES),
        cost_estimate=pl.CostEstimate(
            flops=flops, transcendentals=0, bytes_accessed=bytes_accessed),
    )(lat_stacked, *dec_w)


# ----------------------------------------------------------------------------
# Parameter construction (deterministic, PyTorch-default-style uniform init).
# Weights stored pre-transposed (in, out), zero-padded to lane multiples,
# stacked across modalities, and cast to bf16 (biases stay f32).
# ----------------------------------------------------------------------------
def _init_linear(key, in_dim, out_dim):
    kw, kb = jax.random.split(key)
    bound = 1.0 / np.sqrt(in_dim)
    w = jax.random.uniform(kw, (in_dim, out_dim), minval=-bound, maxval=bound,
                           dtype=jnp.float32)
    b = jax.random.uniform(kb, (out_dim,), minval=-bound, maxval=bound,
                           dtype=jnp.float32)
    return w, b


def build_uniembed_params(key, modality_input_dims, hidden_size_1,
                          hidden_size_2, latent_dim):
    # TODO(synk): pad each modality to its own round_up(in_dim, 128) and bucket
    # modalities by padded width (one call per bucket) instead of padding every
    # modality to the max input width; matters when input dims are heterogeneous.
    names = list(modality_input_dims.keys())
    in_pad = max(_round_up(d, _LANE) for d in modality_input_dims.values())
    h1p = _round_up(hidden_size_1, _LANE)
    h2p = _round_up(hidden_size_2, _LANE)
    latp = _round_up(latent_dim, _LANE)

    keys = ("w1", "b1", "w2", "b2", "w3", "b3")
    enc = {k: [] for k in keys}
    dec = {k: [] for k in keys}
    bf = jnp.bfloat16
    for name in names:
        in_dim = modality_input_dims[name]
        key, k1, k2, k3, k4, k5, k6 = jax.random.split(key, 7)
        e1w, e1b = _init_linear(k1, in_dim, hidden_size_1)
        e2w, e2b = _init_linear(k2, hidden_size_1, hidden_size_2)
        e3w, e3b = _init_linear(k3, hidden_size_2, latent_dim)
        d1w, d1b = _init_linear(k4, latent_dim, hidden_size_2)
        d2w, d2b = _init_linear(k5, hidden_size_2, hidden_size_1)
        d3w, d3b = _init_linear(k6, hidden_size_1, in_dim)
        enc["w1"].append(_pad2(e1w, in_pad, h1p).astype(bf))
        enc["b1"].append(_pad2(e1b[None], 1, h1p))
        enc["w2"].append(_pad2(e2w, h1p, h2p).astype(bf))
        enc["b2"].append(_pad2(e2b[None], 1, h2p))
        enc["w3"].append(_pad2(e3w, h2p, latp).astype(bf))
        enc["b3"].append(_pad2(e3b[None], 1, latp))
        dec["w1"].append(_pad2(d1w, latp, h2p).astype(bf))
        dec["b1"].append(_pad2(d1b[None], 1, h2p))
        dec["w2"].append(_pad2(d2w, h2p, h1p).astype(bf))
        dec["b2"].append(_pad2(d2b[None], 1, h1p))
        dec["w3"].append(_pad2(d3w, h1p, in_pad).astype(bf))
        dec["b3"].append(_pad2(d3b[None], 1, in_pad))

    return {
        "names": names,
        "input_dims": dict(modality_input_dims),
        "hidden": (hidden_size_1, hidden_size_2),
        "latent_dim": latent_dim,
        "dims_padded": {"in": in_pad, "h1": h1p, "h2": h2p, "lat": latp},
        "enc": {k: jnp.stack(v) for k, v in enc.items()},
        "dec": {k: jnp.stack(v) for k, v in dec.items()},
    }


# ----------------------------------------------------------------------------
# Forward pass (mirrors uniembed_nn.forward; Dropout is identity in eval mode)
# ----------------------------------------------------------------------------
def uniembed_forward(params, inputs, l2_norm=True):
    names = params["names"]
    assert set(inputs) == set(names)
    batch = next(iter(inputs.values())).shape[0]
    in_pad = params["dims_padded"]["in"]
    latp = params["dims_padded"]["lat"]
    latent_dim = params["latent_dim"]

    # TODO(synk): 1-D (unbatched) inputs normalize along dim=0 in torch; only
    # the batched 2-D case is implemented here.

    bp = _round_up(batch, _SUBLANE_BF16)
    if bp > _TILE_ROWS_TARGET:
        tile_rows = _TILE_ROWS_TARGET
        bp = _round_up(batch, tile_rows)
    else:
        tile_rows = bp

    # Stack all modality inputs into one (M, BP, IN_P) bf16 slab.
    # TODO(synk): hoist this pad/stack out of the per-forward path (it makes an
    # extra HBM copy of the inputs each call).
    x_stacked = jnp.stack(
        [_pad2(inputs[name].astype(jnp.bfloat16), bp, in_pad)
         for name in names], axis=0)

    enc_w = [params["enc"][k] for k in ("w1", "b1", "w2", "b2", "w3", "b3")]
    dec_w = [params["dec"][k] for k in ("w1", "b1", "w2", "b2", "w3", "b3")]

    # 1 launch for all encoders, 1 launch for all decoders x all latents.
    lat_stacked = _run_encoders(x_stacked, enc_w, l2_norm=l2_norm,
                                tile_rows=tile_rows, latent_pad=latp)
    out_stacked = _run_decoders(lat_stacked, dec_w, tile_rows=tile_rows,
                                out_pad=in_pad)

    latents = {}
    for m, name in enumerate(names):
        latents[name] = lat_stacked[m, :batch, :latent_dim].astype(jnp.float32)
    outputs = {}
    for m_enc, enc_name in enumerate(names):
        for m_dec, dec_name in enumerate(names):
            out_dim = params["input_dims"][dec_name]
            outputs[enc_name + MODALITY_SEP + dec_name] = (
                out_stacked[m_dec, m_enc, :batch, :out_dim])
    return latents, outputs


# ----------------------------------------------------------------------------
# Plain-JAX reference (unpadded, f32 math on the stored weights).
# ----------------------------------------------------------------------------
def _ref_forward(params, inputs, l2_norm=True):
    names = params["names"]
    h1d, h2d = params["hidden"]
    lat = params["latent_dim"]
    f32 = jnp.float32
    latents, outputs = {}, {}
    for m, name in enumerate(names):
        in_dim = params["input_dims"][name]
        w1 = params["enc"]["w1"][m, :in_dim, :h1d].astype(f32)
        b1 = params["enc"]["b1"][m, 0, :h1d]
        w2 = params["enc"]["w2"][m, :h1d, :h2d].astype(f32)
        b2 = params["enc"]["b2"][m, 0, :h2d]
        w3 = params["enc"]["w3"][m, :h2d, :lat].astype(f32)
        b3 = params["enc"]["b3"][m, 0, :lat]
        y = jnp.maximum(inputs[name] @ w1 + b1, 0.0)
        y = jnp.maximum(y @ w2 + b2, 0.0)
        y = y @ w3 + b3
        if l2_norm:
            n = jnp.sqrt(jnp.sum(y * y, axis=1, keepdims=True))
            y = y / jnp.maximum(n, 1e-12)
        latents[name] = y
    for en in names:
        for m_d, dn in enumerate(names):
            out_dim = params["input_dims"][dn]
            w1 = params["dec"]["w1"][m_d, :lat, :h2d].astype(f32)
            b1 = params["dec"]["b1"][m_d, 0, :h2d]
            w2 = params["dec"]["w2"][m_d, :h2d, :h1d].astype(f32)
            b2 = params["dec"]["b2"][m_d, 0, :h1d]
            w3 = params["dec"]["w3"][m_d, :h1d, :out_dim].astype(f32)
            b3 = params["dec"]["b3"][m_d, 0, :out_dim]
            y = jnp.maximum(latents[en] @ w1 + b1, 0.0)
            y = jnp.maximum(y @ w2 + b2, 0.0)
            outputs[en + MODALITY_SEP + dn] = y @ w3 + b3
    return latents, outputs


if __name__ == "__main__":
    key = jax.random.PRNGKey(0)

    # Small, forward-consistent shapes.
    batch = 8
    hidden_size_1 = 64
    hidden_size_2 = 32
    latent_dim = 16
    modality_input_dims = {"img": 32, "seq": 48}

    key, kp, kx1, kx2 = jax.random.split(key, 4)
    params = build_uniembed_params(kp, modality_input_dims,
                                   hidden_size_1, hidden_size_2, latent_dim)

    inputs = {
        "img": jax.random.normal(kx1, (batch, modality_input_dims["img"]),
                                 dtype=jnp.float32),
        "seq": jax.random.normal(kx2, (batch, modality_input_dims["seq"]),
                                 dtype=jnp.float32),
    }

    latents, outputs = uniembed_forward(params, inputs, l2_norm=True)
    jax.block_until_ready((latents, outputs))

    # Shape sanity checks.
    for name in inputs:
        assert latents[name].shape == (batch, latent_dim)
    for enc_name in inputs:
        for dec_name in inputs:
            k = enc_name + MODALITY_SEP + dec_name
            assert outputs[k].shape == (batch, modality_input_dims[dec_name])

    # Numerical check vs a plain-JAX f32 reference (kernel runs bf16 matmuls
    # with f32 accumulation, so allow bf16-level tolerance).
    ref_lat, ref_out = _ref_forward(params, inputs, l2_norm=True)
    for name in inputs:
        np.testing.assert_allclose(np.asarray(latents[name]),
                                   np.asarray(ref_lat[name]),
                                   rtol=2e-2, atol=2e-2)
    for k in outputs:
        np.testing.assert_allclose(np.asarray(outputs[k]),
                                   np.asarray(ref_out[k]),
                                   rtol=2e-2, atol=2e-2)

    print("KERNEL_OK")
</pallas_src>

<mosaic_0001>
module attributes {stable_mosaic.version = 11 : i64} {
  func.func @_encoder_kernel(%arg0: i32, %arg1: i32, %arg2: memref<1x16x128xbf16, #tpu.memory_space<vmem>>, %arg3: memref<1x128x128xbf16, #tpu.memory_space<vmem>>, %arg4: memref<1x1x128xf32, #tpu.memory_space<vmem>>, %arg5: memref<1x128x128xbf16, #tpu.memory_space<vmem>>, %arg6: memref<1x1x128xf32, #tpu.memory_space<vmem>>, %arg7: memref<1x128x128xbf16, #tpu.memory_space<vmem>>, %arg8: memref<1x1x128xf32, #tpu.memory_space<vmem>>, %arg9: memref<1x16x128xbf16, #tpu.memory_space<vmem>>) attributes {dimension_semantics = [#tpu.dimension_semantics<parallel>, #tpu.dimension_semantics<parallel>], iteration_bounds = array<i64: 2, 1>, scalar_prefetch = 0 : i64, scratch_operands = 0 : i64, tpu.core_type = #tpu.core_type<tc>, window_params = [{transform_indices = @transform_0, window_bounds = array<i64: 1, 16, 128>}, {transform_indices = @transform_1, window_bounds = array<i64: 1, 128, 128>}, {transform_indices = @transform_2, window_bounds = array<i64: 1, 1, 128>}, {transform_indices = @transform_3, window_bounds = array<i64: 1, 128, 128>}, {transform_indices = @transform_4, window_bounds = array<i64: 1, 1, 128>}, {transform_indices = @transform_5, window_bounds = array<i64: 1, 128, 128>}, {transform_indices = @transform_6, window_bounds = array<i64: 1, 1, 128>}, {transform_indices = @transform_7, window_bounds = array<i64: 1, 16, 128>}]} {
    %c0 = arith.constant 0 : index
    %c0_0 = arith.constant 0 : index
    %c0_1 = arith.constant 0 : index
    %0 = vector.load %arg2[%c0, %c0_0, %c0_1] : memref<1x16x128xbf16, #tpu.memory_space<vmem>>, vector<1x16x128xbf16>
    %1 = vector.shape_cast %0 : vector<1x16x128xbf16> to vector<16x128xbf16>
    %c0_2 = arith.constant 0 : index
    %c0_3 = arith.constant 0 : index
    %c0_4 = arith.constant 0 : index
    %2 = vector.load %arg3[%c0_2, %c0_3, %c0_4] : memref<1x128x128xbf16, #tpu.memory_space<vmem>>, vector<1x128x128xbf16>
    %3 = vector.shape_cast %2 : vector<1x128x128xbf16> to vector<128x128xbf16>
    %cst = arith.constant dense<0.000000e+00> : vector<16x128xf32>
    %4 = tpu.matmul %1, %3, %cst {dimension_numbers = #tpu.dot_dimension_numbers<[1], [0], [0], [1], [0, 0, 1, 1], [], []>} : vector<16x128xbf16>, vector<128x128xbf16>, vector<16x128xf32> -> vector<16x128xf32>
    %c0_5 = arith.constant 0 : index
    %c0_6 = arith.constant 0 : index
    %c0_7 = arith.constant 0 : index
    %5 = vector.load %arg4[%c0_5, %c0_6, %c0_7] : memref<1x1x128xf32, #tpu.memory_space<vmem>>, vector<1x1x128xf32>
    %6 = vector.shape_cast %5 : vector<1x1x128xf32> to vector<1x128xf32>
    %7 = vector.broadcast %6 : vector<1x128xf32> to vector<16x128xf32>
    %8 = arith.addf %4, %7 : vector<16x128xf32>
    %cst_8 = arith.constant 0.000000e+00 : f32
    %9 = vector.broadcast %cst_8 : f32 to vector<16x128xf32>
    %10 = arith.maximumf %8, %9 : vector<16x128xf32>
    %11 = arith.truncf %10 : vector<16x128xf32> to vector<16x128xbf16>
    %c0_9 = arith.constant 0 : index
    %c0_10 = arith.constant 0 : index
    %c0_11 = arith.constant 0 : index
    %12 = vector.load %arg5[%c0_9, %c0_10, %c0_11] : memref<1x128x128xbf16, #tpu.memory_space<vmem>>, vector<1x128x128xbf16>
    %13 = vector.shape_cast %12 : vector<1x128x128xbf16> to vector<128x128xbf16>
    %cst_12 = arith.constant dense<0.000000e+00> : vector<16x128xf32>
    %14 = tpu.matmul %11, %13, %cst_12 {dimension_numbers = #tpu.dot_dimension_numbers<[1], [0], [0], [1], [0, 0, 1, 1], [], []>} : vector<16x128xbf16>, vector<128x128xbf16>, vector<16x128xf32> -> vector<16x128xf32>
    %c0_13 = arith.constant 0 : index
    %c0_14 = arith.constant 0 : index
    %c0_15 = arith.constant 0 : index
    %15 = vector.load %arg6[%c0_13, %c0_14, %c0_15] : memref<1x1x128xf32, #tpu.memory_space<vmem>>, vector<1x1x128xf32>
    %16 = vector.shape_cast %15 : vector<1x1x128xf32> to vector<1x128xf32>
    %17 = vector.broadcast %16 : vector<1x128xf32> to vector<16x128xf32>
    %18 = arith.addf %14, %17 : vector<16x128xf32>
    %cst_16 = arith.constant 0.000000e+00 : f32
    %19 = vector.broadcast %cst_16 : f32 to vector<16x128xf32>
    %20 = arith.maximumf %18, %19 : vector<16x128xf32>
    %21 = arith.truncf %20 : vector<16x128xf32> to vector<16x128xbf16>
    %c0_17 = arith.constant 0 : index
    %c0_18 = arith.constant 0 : index
    %c0_19 = arith.constant 0 : index
    %22 = vector.load %arg7[%c0_17, %c0_18, %c0_19] : memref<1x128x128xbf16, #tpu.memory_space<vmem>>, vector<1x128x128xbf16>
    %23 = vector.shape_cast %22 : vector<1x128x128xbf16> to vector<128x128xbf16>
    %cst_20 = arith.constant dense<0.000000e+00> : vector<16x128xf32>
    %24 = tpu.matmul %21, %23, %cst_20 {dimension_numbers = #tpu.dot_dimension_numbers<[1], [0], [0], [1], [0, 0, 1, 1], [], []>} : vector<16x128xbf16>, vector<128x128xbf16>, vector<16x128xf32> -> vector<16x128xf32>
    %c0_21 = arith.constant 0 : index
    %c0_22 = arith.constant 0 : index
    %c0_23 = arith.constant 0 : index
    %25 = vector.load %arg8[%c0_21, %c0_22, %c0_23] : memref<1x1x128xf32, #tpu.memory_space<vmem>>, vector<1x1x128xf32>
    %26 = vector.shape_cast %25 : vector<1x1x128xf32> to vector<1x128xf32>
    %27 = vector.broadcast %26 : vector<1x128xf32> to vector<16x128xf32>
    %28 = arith.addf %24, %27 : vector<16x128xf32>
    %29 = arith.mulf %28, %28 : vector<16x128xf32>
    %cst_24 = arith.constant dense<0.000000e+00> : vector<16xf32>
    %30 = vector.multi_reduction <add>, %29, %cst_24 [1] : vector<16x128xf32> to vector<16xf32>
    %31 = vector.shape_cast %30 : vector<16xf32> to vector<16x1xf32>
    %cst_25 = arith.constant 1.000000e-24 : f32
    %32 = vector.broadcast %cst_25 : f32 to vector<16x1xf32>
    %33 = arith.maximumf %31, %32 : vector<16x1xf32>
    %34 = math.rsqrt %33 : vector<16x1xf32>
    %35 = vector.broadcast %34 : vector<16x1xf32> to vector<16x128xf32>
    %36 = arith.mulf %28, %35 : vector<16x128xf32>
    %37 = arith.truncf %36 : vector<16x128xf32> to vector<16x128xbf16>
    %c0_26 = arith.constant 0 : index
    %c0_27 = arith.constant 0 : index
    %c0_28 = arith.constant 0 : index
    %38 = vector.load %arg9[%c0_26, %c0_27, %c0_28] : memref<1x16x128xbf16, #tpu.memory_space<vmem>>, vector<1x16x128xbf16>
    %39 = vector.shape_cast %38 : vector<1x16x128xbf16> to vector<16x128xbf16>
    %40 = vector.shape_cast %37 : vector<16x128xbf16> to vector<1x16x128xbf16>
    tpu.vector_store %arg9[%c0_26, %c0_27, %c0_28], %40 {strides = array<i32>} : memref<1x16x128xbf16, #tpu.memory_space<vmem>>, vector<1x16x128xbf16>,
    return
  }
  func.func @transform_0(%arg0: i32, %arg1: i32) -> (i32, i32, i32) {
    %c0_i32 = arith.constant 0 : i32
    %c0_i32_0 = arith.constant 0 : i32
    return %arg0, %arg1, %c0_i32 : i32, i32, i32
  }
  func.func @transform_1(%arg0: i32, %arg1: i32) -> (i32, i32, i32) {
    %c0_i32 = arith.constant 0 : i32
    %c0_i32_0 = arith.constant 0 : i32
    %c0_i32_1 = arith.constant 0 : i32
    return %arg0, %c0_i32, %c0_i32_0 : i32, i32, i32
  }
  func.func @transform_2(%arg0: i32, %arg1: i32) -> (i32, i32, i32) {
    %c0_i32 = arith.constant 0 : i32
    %c0_i32_0 = arith.constant 0 : i32
    %c0_i32_1 = arith.constant 0 : i32
    return %arg0, %c0_i32, %c0_i32_0 : i32, i32, i32
  }
  func.func @transform_3(%arg0: i32, %arg1: i32) -> (i32, i32, i32) {
    %c0_i32 = arith.constant 0 : i32
    %c0_i32_0 = arith.constant 0 : i32
    %c0_i32_1 = arith.constant 0 : i32
    return %arg0, %c0_i32, %c0_i32_0 : i32, i32, i32
  }
  func.func @transform_4(%arg0: i32, %arg1: i32) -> (i32, i32, i32) {
    %c0_i32 = arith.constant 0 : i32
    %c0_i32_0 = arith.constant 0 : i32
    %c0_i32_1 = arith.constant 0 : i32
    return %arg0, %c0_i32, %c0_i32_0 : i32, i32, i32
  }
  func.func @transform_5(%arg0: i32, %arg1: i32) -> (i32, i32, i32) {
    %c0_i32 = arith.constant 0 : i32
    %c0_i32_0 = arith.constant 0 : i32
    %c0_i32_1 = arith.constant 0 : i32
    return %arg0, %c0_i32, %c0_i32_0 : i32, i32, i32
  }
  func.func @transform_6(%arg0: i32, %arg1: i32) -> (i32, i32, i32) {
    %c0_i32 = arith.constant 0 : i32
    %c0_i32_0 = arith.constant 0 : i32
    %c0_i32_1 = arith.constant 0 : i32
    return %arg0, %c0_i32, %c0_i32_0 : i32, i32, i32
  }
  func.func @transform_7(%arg0: i32, %arg1: i32) -> (i32, i32, i32) {
    %c0_i32 = arith.constant 0 : i32
    %c0_i32_0 = arith.constant 0 : i32
    return %arg0, %arg1, %c0_i32 : i32, i32, i32
  }
}

</mosaic_0001>

<llo_original>
// kernel: tpu_custom_call.1
$region0: #{tpu_custom_call.1}
  #allocation0 [shape = 'u32[]', space=smem, size = 0x4, offset = 0x4, fixed_abs, tag = 'smem constant byte address 0x4 - core index']
  #allocation1 [shape = 'u32[144,128]{1,0:T(1,128)}', space=vmem, size = 0x12000, scoped, tag = 'internal scratch']
  %s0 = inlined_call_operand.hbm [shape: bf16[2,16,128], index: 0, kind: input, shape index: {}]
  %s1 = inlined_call_operand.hbm [shape: bf16[2,128,128], index: 1, kind: input, shape index: {}]
  %s2 = inlined_call_operand.vmem [shape: f32[2,1,128], index: 2, kind: input, shape index: {}]
  %s3 = inlined_call_operand.hbm [shape: bf16[2,128,128], index: 3, kind: input, shape index: {}]
  %s4 = inlined_call_operand.vmem [shape: f32[2,1,128], index: 4, kind: input, shape index: {}]
  %s5 = inlined_call_operand.hbm [shape: bf16[2,128,128], index: 5, kind: input, shape index: {}]
  %s6 = inlined_call_operand.vmem [shape: f32[2,1,128], index: 6, kind: input, shape index: {}]
  %s7 = inlined_call_operand.hbm [shape: bf16[2,16,128], index: 7, kind: output, shape index: {}]
  %s8 = sld [smem:[#allocation0]]
  $region77: #{tpu_custom_call.1} parent=0
    _
  %s10 = ssub.s32 1, %s8
  %s11 = scalar_select 0, %s10, %s8
  $region1: #{tpu_custom_call.1} parent=0
    #allocation2 [shape = 'u8[8192]{0}', space=vmem, size = 0x2000, scoped, tag = 'input window, operand 0']
    #allocation3 [shape = 's32[2]{0}', space=sflag, size = 0x8, scoped, tag = 'scoped memory for tpu_custom_call.1']
    #allocation4 [shape = 's32[2]{0}', space=sflag, size = 0x8, scoped, tag = 'scoped memory for tpu_custom_call.1']
    #allocation5 [shape = 'u8[65536]{0}', space=vmem, size = 0x10000, scoped, tag = 'input window, operand 1']
    #allocation6 [shape = 's32[2]{0}', space=sflag, size = 0x8, scoped, tag = 'scoped memory for tpu_custom_call.1']
    #allocation7 [shape = 'u8[65536]{0}', space=vmem, size = 0x10000, scoped, tag = 'input window, operand 3']
    #allocation8 [shape = 'u8[65536]{0}', space=vmem, size = 0x10000, scoped, tag = 'input window, operand 5']
    #allocation9 [shape = 's32[2]{0}', space=sflag, size = 0x8, scoped, tag = 'scoped memory for tpu_custom_call.1']
    #allocation10 [shape = 'u8[8192]{0}', space=vmem, size = 0x2000, scoped, tag = 'output window, operand 0']
    %12 = vsyncpa [#allocation3], 0
    %s13 = scalar_lea.sflag [#allocation3], 1
    %14 = vsyncpa %s13, 0
    %15 = vsyncpa [#allocation6], 0
    %s16 = scalar_lea.sflag [#allocation6], 1
    %17 = vsyncpa %s16, 0
    %18 = vsyncpa [#allocation9], 0
    %s19 = scalar_lea.sflag [#allocation9], 1
    %20 = vsyncpa %s19, 0
    %21 = vsyncpa [#allocation4], 0
    %s22 = scalar_lea.sflag [#allocation4], 1
    %23 = vsyncpa %s22, 0
    loop: start=0, step=1, limit=4
    $region2: #{tpu_custom_call.1} parent=1 // loop_pre_header
      _
    $region3: #{tpu_custom_call.1} parent=1 // loop_header
      %s25 = sphi 0, %s29
      %p26 = scmp.ge.s32.totalorder %s25, 4
      %s32 = sphi 0, %s44
      %s33 = sphi 0, %s40
      %s34 = sphi 0, %s32
      %s35 = sphi 0, %s33
      %s36 = sphi 0, %s34
      %s37 = sphi 0, %s35
      %s49 = sphi 0, %s51
      %s52 = sphi 0, %s49
      %s53 = sphi 0, %s52
      %s69 = sphi 0, %s53
      %s75 = sphi 0, %s77
      %s78 = sphi 0, %s75
      %s79 = sphi 0, %s78
      %s95 = sphi 0, %s79
      %s101 = sphi 0, %s103
      %s104 = sphi 0, %s101
      %s105 = sphi 0, %s104
      %s121 = sphi 0, %s105
      %s127 = sphi 0, %s129
      %s130 = sphi 0, %s127
      %s131 = sphi 0, %s130
      %s147 = sphi 0, %s131
      %s153 = sphi 0, %s155
      %s156 = sphi 0, %s153
      %s157 = sphi 0, %s156
      %s173 = sphi 0, %s157
      %s179 = sphi 0, %s181
      %s182 = sphi 0, %s179
      %s183 = sphi 0, %s182
      %s199 = sphi 0, %s183
      %s205 = sphi 0, %s207
      %s208 = sphi 0, %s205
      %s209 = sphi 0, %s208
      %s225 = sphi 0, %s209
      %s233 = sphi 0, %s235
      %s236 = sphi 0, %s233
      %s237 = sphi 0, %s236
      %s253 = sphi 0, %s237
    $region4: #{tpu_custom_call.1} parent=1 // loop_header_branch
      %28 = sbr.rel (%p26) target = $region8
    $region5: #{tpu_custom_call.1} parent=1 // loop_body
      %s30 = ssub.s32 %s25, 1
      %s31 = ssub.s32 %s25, 2
      %s38 = sadd.s32 1, %s33
      %p39 = scmp.ge.s32.totalorder %s38, 1
      %s40 = scalar_select %p39, 0, %s38
      %s41 = sadd.s32 1, %s32
      %s42 = scalar_select %p39, %s41, %s32
      %p43 = scmp.ge.s32.totalorder %s42, 2
      %s44 = scalar_select %p43, 0, %s42
      %s45 = ssub.s32 %s32, %s44
      %s46 = ssub.s32 %s33, %s40
      %s47 = sor.u32 %s45, %s46
      %p48 = scmp.eq.s32.totalorder %s47, 0
      %s50 = sadd.s32 %s49, 1
      %s51 = scalar_select %p48, %s49, %s50
      %p54 = pneg %p48
      %p55 = scmp.eq.s32.totalorder %s25, 1
      %p56 = por %p54, %p55
      %p57 = scmp.ne.s32.totalorder %s49, %s52
      %p58 = scmp.eq.s32.totalorder %s25, 0
      %p59 = por %p57, %p58
      %p60 = scmp.ne.s32.totalorder %s49, %s52
      %p61 = scmp.eq.s32.totalorder %s30, 1
      %p62 = por %p60, %p61
      %p63 = scmp.ne.s32.totalorder %s52, %s53
      %p64 = scmp.eq.s32.totalorder %s30, 0
      %p65 = por %p63, %p64
      %p66 = scmp.ne.s32.totalorder %s52, %s53
      %p67 = scmp.eq.s32.totalorder %s31, 1
      %p68 = por %p66, %p67
      %p70 = scmp.ne.s32.totalorder %s53, %s69
      %p71 = scmp.eq.s32.totalorder %s31, 0
      %p72 = por %p70, %p71
      %s73 = ssub.s32 %s32, %s44
      %p74 = scmp.eq.s32.totalorder %s73, 0
      %s76 = sadd.s32 %s75, 1
      %s77 = scalar_select %p74, %s75, %s76
      %p80 = pneg %p74
      %p81 = scmp.eq.s32.totalorder %s25, 1
      %p82 = por %p80, %p81
      %p83 = scmp.ne.s32.totalorder %s75, %s78
      %p84 = scmp.eq.s32.totalorder %s25, 0
      %p85 = por %p83, %p84
      %p86 = scmp.ne.s32.totalorder %s75, %s78
      %p87 = scmp.eq.s32.totalorder %s30, 1
      %p88 = por %p86, %p87
      %p89 = scmp.ne.s32.totalorder %s78, %s79
      %p90 = scmp.eq.s32.totalorder %s30, 0
      %p91 = por %p89, %p90
      %p92 = scmp.ne.s32.totalorder %s78, %s79
      %p93 = scmp.eq.s32.totalorder %s31, 1
      %p94 = por %p92, %p93
      %p96 = scmp.ne.s32.totalorder %s79, %s95
      %p97 = scmp.eq.s32.totalorder %s31, 0
      %p98 = por %p96, %p97
      %s99 = ssub.s32 %s32, %s44
      %p100 = scmp.eq.s32.totalorder %s99, 0
      %s102 = sadd.s32 %s101, 1
      %s103 = scalar_select %p100, %s101, %s102
      %p106 = pneg %p100
      %p107 = scmp.eq.s32.totalorder %s25, 1
      %p108 = por %p106, %p107
      %p109 = scmp.ne.s32.totalorder %s101, %s104
      %p110 = scmp.eq.s32.totalorder %s25, 0
      %p111 = por %p109, %p110
      %p112 = scmp.ne.s32.totalorder %s101, %s104
      %p113 = scmp.eq.s32.totalorder %s30, 1
      %p114 = por %p112, %p113
      %p115 = scmp.ne.s32.totalorder %s104, %s105
      %p116 = scmp.eq.s32.totalorder %s30, 0
      %p117 = por %p115, %p116
      %p118 = scmp.ne.s32.totalorder %s104, %s105
      %p119 = scmp.eq.s32.totalorder %s31, 1
      %p120 = por %p118, %p119
      %p122 = scmp.ne.s32.totalorder %s105, %s121
      %p123 = scmp.eq.s32.totalorder %s31, 0
      %p124 = por %p122, %p123
      %s125 = ssub.s32 %s32, %s44
      %p126 = scmp.eq.s32.totalorder %s125, 0
      %s128 = sadd.s32 %s127, 1
      %s129 = scalar_select %p126, %s127, %s128
      %p132 = pneg %p126
      %p133 = scmp.eq.s32.totalorder %s25, 1
      %p134 = por %p132, %p133
      %p135 = scmp.ne.s32.totalorder %s127, %s130
      %p136 = scmp.eq.s32.totalorder %s25, 0
      %p137 = por %p135, %p136
      %p138 = scmp.ne.s32.totalorder %s127, %s130
      %p139 = scmp.eq.s32.totalorder %s30, 1
      %p140 = por %p138, %p139
      %p141 = scmp.ne.s32.totalorder %s130, %s131
      %p142 = scmp.eq.s32.totalorder %s30, 0
      %p143 = por %p141, %p142
      %p144 = scmp.ne.s32.totalorder %s130, %s131
      %p145 = scmp.eq.s32.totalorder %s31, 1
      %p146 = por %p144, %p145
      %p148 = scmp.ne.s32.totalorder %s131, %s147
      %p149 = scmp.eq.s32.totalorder %s31, 0
      %p150 = por %p148, %p149
      %s151 = ssub.s32 %s32, %s44
      %p152 = scmp.eq.s32.totalorder %s151, 0
      %s154 = sadd.s32 %s153, 1
      %s155 = scalar_select %p152, %s153, %s154
      %p158 = pneg %p152
      %p159 = scmp.eq.s32.totalorder %s25, 1
      %p160 = por %p158, %p159
      %p161 = scmp.ne.s32.totalorder %s153, %s156
      %p162 = scmp.eq.s32.totalorder %s25, 0
      %p163 = por %p161, %p162
      %p164 = scmp.ne.s32.totalorder %s153, %s156
      %p165 = scmp.eq.s32.totalorder %s30, 1
      %p166 = por %p164, %p165
      %p167 = scmp.ne.s32.totalorder %s156, %s157
      %p168 = scmp.eq.s32.totalorder %s30, 0
      %p169 = por %p167, %p168
      %p170 = scmp.ne.s32.totalorder %s156, %s157
      %p171 = scmp.eq.s32.totalorder %s31, 1
      %p172 = por %p170, %p171
      %p174 = scmp.ne.s32.totalorder %s157, %s173
      %p175 = scmp.eq.s32.totalorder %s31, 0
      %p176 = por %p174, %p175
      %s177 = ssub.s32 %s32, %s44
      %p178 = scmp.eq.s32.totalorder %s177, 0
      %s180 = sadd.s32 %s179, 1
      %s181 = scalar_select %p178, %s179, %s180
      %p184 = pneg %p178
      %p185 = scmp.eq.s32.totalorder %s25, 1
      %p186 = por %p184, %p185
      %p187 = scmp.ne.s32.totalorder %s179, %s182
      %p188 = scmp.eq.s32.totalorder %s25, 0
      %p189 = por %p187, %p188
      %p190 = scmp.ne.s32.totalorder %s179, %s182
      %p191 = scmp.eq.s32.totalorder %s30, 1
      %p192 = por %p190, %p191
      %p193 = scmp.ne.s32.totalorder %s182, %s183
      %p194 = scmp.eq.s32.totalorder %s30, 0
      %p195 = por %p193, %p194
      %p196 = scmp.ne.s32.totalorder %s182, %s183
      %p197 = scmp.eq.s32.totalorder %s31, 1
      %p198 = por %p196, %p197
      %p200 = scmp.ne.s32.totalorder %s183, %s199
      %p201 = scmp.eq.s32.totalorder %s31, 0
      %p202 = por %p200, %p201
      %s203 = ssub.s32 %s32, %s44
      %p204 = scmp.eq.s32.totalorder %s203, 0
      %s206 = sadd.s32 %s205, 1
      %s207 = scalar_select %p204, %s205, %s206
      %p210 = pneg %p204
      %p211 = scmp.eq.s32.totalorder %s25, 1
      %p212 = por %p210, %p211
      %p213 = scmp.ne.s32.totalorder %s205, %s208
      %p214 = scmp.eq.s32.totalorder %s25, 0
      %p215 = por %p213, %p214
      %p216 = scmp.ne.s32.totalorder %s205, %s208
      %p217 = scmp.eq.s32.totalorder %s30, 1
      %p218 = por %p216, %p217
      %p219 = scmp.ne.s32.totalorder %s208, %s209
      %p220 = scmp.eq.s32.totalorder %s30, 0
      %p221 = por %p219, %p220
      %p222 = scmp.ne.s32.totalorder %s208, %s209
      %p223 = scmp.eq.s32.totalorder %s31, 1
      %p224 = por %p222, %p223
      %p226 = scmp.ne.s32.totalorder %s209, %s225
      %p227 = scmp.eq.s32.totalorder %s31, 0
      %p228 = por %p226, %p227
      %s229 = ssub.s32 %s32, %s44
      %s230 = ssub.s32 %s33, %s40
      %s231 = sor.u32 %s229, %s230
      %p232 = scmp.eq.s32.totalorder %s231, 0
      %s234 = sadd.s32 %s233, 1
      %s235 = scalar_select %p232, %s233, %s234
      %p238 = pneg %p232
      %p239 = scmp.eq.s32.totalorder %s25, 1
      %p240 = por %p238, %p239
      %p241 = scmp.ne.s32.totalorder %s233, %s236
      %p242 = scmp.eq.s32.totalorder %s25, 0
      %p243 = por %p241, %p242
      %p244 = scmp.ne.s32.totalorder %s233, %s236
      %p245 = scmp.eq.s32.totalorder %s30, 1
      %p246 = por %p244, %p245
      %p247 = scmp.ne.s32.totalorder %s236, %s237
      %p248 = scmp.eq.s32.totalorder %s30, 0
      %p249 = por %p247, %p248
      %p250 = scmp.ne.s32.totalorder %s236, %s237
      %p251 = scmp.eq.s32.totalorder %s31, 1
      %p252 = por %p250, %p251
      %p254 = scmp.ne.s32.totalorder %s237, %s253
      %p255 = scmp.eq.s32.totalorder %s31, 0
      %p256 = por %p254, %p255
      %p257 = scmp.le.s32.totalorder 1, %s25
      %p258 = scmp.lt.s32.totalorder %s25, 3
      %p259 = pnand %p257, %p258
      %p260 = pneg %p259
      // Predicated region
      $region9: #{tpu_custom_call.1} parent=5 // pred_check
        _
      $region10: #{tpu_custom_call.1} parent=5 // pred_check_branch
        %262 = sbr.rel (%p259) target = $region12
      $region11: #{tpu_custom_call.1} parent=5 // pred_region
        %s263 = ssub.s32 %s25, 1
      $region12: #{tpu_custom_call.1} parent=5 // pred_fallthru
        _
      %p264 = scmp.lt.s32.totalorder %s25, 2
      // Predicated region
      $region13: #{tpu_custom_call.1} parent=5 // pred_check
        %p265 = pneg %p264
      $region14: #{tpu_custom_call.1} parent=5 // pred_check_branch
        %267 = sbr.rel (%p265) target = $region16
      $region15: #{tpu_custom_call.1} parent=5 // pred_region
        // Predicated region
        $region17: #{tpu_custom_call.1} parent=15 // pred_check
          %p268 = pneg %p59
        $region18: #{tpu_custom_call.1} parent=15 // pred_check_branch
          %270 = sbr.rel (%p268) target = $region20
        $region19: #{tpu_custom_call.1} parent=15 // pred_region
          %s271 = sand.u32 %s49, 1
          %s272 = scalar_lea.sflag [#allocation3], %s271
          %s273 = sand.u32 %s49, 1
          %s274 = smul.addr %s273, 8
          %s275 = scalar_lea.vmem [#allocation2], %s274
          %s276 = smul.u32 2, %s33
          %s278 = ssub.s32 128, 128
          %279 = vsyncadd %s272, %s278
          %s280 = smul.addr %s32, 2
          %s281 = sadd.s32 %s276, %s280
          %s282 = smul.addr %s281, 64
          %s283 = scalar_lea.hbm %s0, %s282
          %s284 = sshll.u32 %s275, 4
          %s285 = int_to_ptr.vmem [resolvable:$true] %s284
          %290 = dma.hbm_to_vmem [thread:$0]  %s283, 128, %s285, %s272, 64, 64, 4
        $region20: #{tpu_custom_call.1} parent=15 // pred_fallthru
          _
        // Predicated region
        $region21: #{tpu_custom_call.1} parent=15 // pred_check
          %p291 = pneg %p85
        $region22: #{tpu_custom_call.1} parent=15 // pred_check_branch
          %293 = sbr.rel (%p291) target = $region24
        $region23: #{tpu_custom_call.1} parent=15 // pred_region
          %s294 = sand.u32 %s25, 1
          %s295 = scalar_lea.sflag [#allocation6], %s294
          %s296 = sand.u32 %s75, 1
          %s297 = smul.addr %s296, 64
          %s298 = scalar_lea.vmem [#allocation5], %s297
          %s300 = ssub.s32 1024, 1024
          %301 = vsyncadd %s295, %s300
          %s302 = smul.addr %s32, 16
          %s303 = smul.addr %s302, 64
          %s304 = scalar_lea.hbm %s1, %s303
          %s305 = sshll.u32 %s298, 4
          %s306 = int_to_ptr.vmem [resolvable:$true] %s305
          %311 = dma.hbm_to_vmem [thread:$0]  %s304, 1024, %s306, %s295, 64, 64, 4
        $region24: #{tpu_custom_call.1} parent=15 // pred_fallthru
          _
        // Predicated region
        $region25: #{tpu_custom_call.1} parent=15 // pred_check
          %p312 = pneg %p111
        $region26: #{tpu_custom_call.1} parent=15 // pred_check_branch
          %314 = sbr.rel (%p312) target = $region28
        $region27: #{tpu_custom_call.1} parent=15 // pred_region
          %p315 = scmp.lt.s32.totalorder %s32, 1
          %s316 = scalar_select %p315, %s32, 1
          %s317 = scalar_lea.vmem %s2, %s316
        $region28: #{tpu_custom_call.1} parent=15 // pred_fallthru
          _
        // Predicated region
        $region29: #{tpu_custom_call.1} parent=15 // pred_check
          %p318 = pneg %p137
        $region30: #{tpu_custom_call.1} parent=15 // pred_check_branch
          %320 = sbr.rel (%p318) target = $region32
        $region31: #{tpu_custom_call.1} parent=15 // pred_region
          %s321 = sand.u32 %s25, 1
          %s322 = scalar_lea.sflag [#allocation6], %s321
          %s323 = sand.u32 %s127, 1
          %s324 = smul.addr %s323, 64
          %s325 = scalar_lea.vmem [#allocation7], %s324
          %s327 = ssub.s32 1024, 1024
          %328 = vsyncadd %s322, %s327
          %s329 = smul.addr %s32, 16
          %s330 = smul.addr %s329, 64
          %s331 = scalar_lea.hbm %s3, %s330
          %s332 = sshll.u32 %s325, 4
          %s333 = int_to_ptr.vmem [resolvable:$true] %s332
          %338 = dma.hbm_to_vmem [thread:$0]  %s331, 1024, %s333, %s322, 64, 64, 4
        $region32: #{tpu_custom_call.1} parent=15 // pred_fallthru
          _
        // Predicated region
        $region33: #{tpu_custom_call.1} parent=15 // pred_check
          %p339 = pneg %p163
        $region34: #{tpu_custom_call.1} parent=15 // pred_check_branch
          %341 = sbr.rel (%p339) target = $region36
        $region35: #{tpu_custom_call.1} parent=15 // pred_region
          %p342 = scmp.lt.s32.totalorder %s32, 1
          %s343 = scalar_select %p342, %s32, 1
          %s344 = scalar_lea.vmem %s4, %s343
        $region36: #{tpu_custom_call.1} parent=15 // pred_fallthru
          _
        // Predicated region
        $region37: #{tpu_custom_call.1} parent=15 // pred_check
          %p345 = pneg %p189
        $region38: #{tpu_custom_call.1} parent=15 // pred_check_branch
          %347 = sbr.rel (%p345) target = $region40
        $region39: #{tpu_custom_call.1} parent=15 // pred_region
          %s348 = sand.u32 %s179, 1
          %s349 = scalar_lea.sflag [#allocation9], %s348
          %s350 = sand.u32 %s179, 1
          %s351 = smul.addr %s350, 64
          %s352 = scalar_lea.vmem [#allocation8], %s351
          %s354 = ssub.s32 1024, 1024
          %355 = vsyncadd %s349, %s354
          %s356 = smul.addr %s32, 16
          %s357 = smul.addr %s356, 64
          %s358 = scalar_lea.hbm %s5, %s357
          %s359 = sshll.u32 %s352, 4
          %s360 = int_to_ptr.vmem [resolvable:$true] %s359
          %365 = dma.hbm_to_vmem [thread:$0]  %s358, 1024, %s360, %s349, 64, 64, 4
        $region40: #{tpu_custom_call.1} parent=15 // pred_fallthru
          _
        // Predicated region
        $region41: #{tpu_custom_call.1} parent=15 // pred_check
          %p366 = pneg %p215
        $region42: #{tpu_custom_call.1} parent=15 // pred_check_branch
          %368 = sbr.rel (%p366) target = $region44
        $region43: #{tpu_custom_call.1} parent=15 // pred_region
          %p369 = scmp.lt.s32.totalorder %s32, 1
          %s370 = scalar_select %p369, %s32, 1
          %s371 = scalar_lea.vmem %s6, %s370
        $region44: #{tpu_custom_call.1} parent=15 // pred_fallthru
          _
      $region16: #{tpu_custom_call.1} parent=5 // pred_fallthru
        _
      %p372 = scmp.le.s32.totalorder 1, %s25
      %p373 = scmp.lt.s32.totalorder %s25, 3
      %p374 = pnand %p372, %p373
      %p375 = pneg %p374
      // Predicated region
      $region45: #{tpu_custom_call.1} parent=5 // pred_check
        _
      $region46: #{tpu_custom_call.1} parent=5 // pred_check_branch
        %377 = sbr.rel (%p374) target = $region48
      $region47: #{tpu_custom_call.1} parent=5 // pred_region
        %s378 = ssub.s32 %s25, 1
        %s379 = sand.u32 %s52, 1
        %s380 = scalar_lea.sflag [#allocation3], %s379
        %s381 = sand.u32 %s52, 1
        %s382 = smul.addr %s381, 8
        %s383 = scalar_lea.vmem [#allocation2], %s382
        // Predicated region
        $region49: #{tpu_custom_call.1} parent=47 // pred_check
          %p384 = pneg %p65
        $region50: #{tpu_custom_call.1} parent=47 // pred_check_branch
          %386 = sbr.rel (%p384) target = $region52
        $region51: #{tpu_custom_call.1} parent=47 // pred_region
          %387 = dma.done %s380, 128
        $region52: #{tpu_custom_call.1} parent=47 // pred_fallthru
          _
        %s388 = sand.u32 %s30, 1
        %s389 = scalar_lea.sflag [#allocation6], %s388
        %s390 = sand.u32 %s78, 1
        %s391 = smul.addr %s390, 64
        %s392 = scalar_lea.vmem [#allocation5], %s391
        // Predicated region
        $region53: #{tpu_custom_call.1} parent=47 // pred_check
          %p393 = pneg %p91
        $region54: #{tpu_custom_call.1} parent=47 // pred_check_branch
          %395 = sbr.rel (%p393) target = $region56
        $region55: #{tpu_custom_call.1} parent=47 // pred_region
          %396 = dma.done %s389, 1024
        $region56: #{tpu_custom_call.1} parent=47 // pred_fallthru
          _
        %s397 = sand.u32 %s30, 1
        %s398 = scalar_lea.sflag [#allocation6], %s397
        %s399 = sand.u32 %s130, 1
        %s400 = smul.addr %s399, 64
        %s401 = scalar_lea.vmem [#allocation7], %s400
        // Predicated region
        $region57: #{tpu_custom_call.1} parent=47 // pred_check
          %p402 = pneg %p143
        $region58: #{tpu_custom_call.1} parent=47 // pred_check_branch
          %404 = sbr.rel (%p402) target = $region60
        $region59: #{tpu_custom_call.1} parent=47 // pred_region
          %405 = dma.done %s398, 1024
        $region60: #{tpu_custom_call.1} parent=47 // pred_fallthru
          _
        %s406 = sand.u32 %s182, 1
        %s407 = scalar_lea.sflag [#allocation9], %s406
        %s408 = sand.u32 %s182, 1
        %s409 = smul.addr %s408, 64
        %s410 = scalar_lea.vmem [#allocation8], %s409
        // Predicated region
        $region61: #{tpu_custom_call.1} parent=47 // pred_check
          %p411 = pneg %p195
        $region62: #{tpu_custom_call.1} parent=47 // pred_check_branch
          %413 = sbr.rel (%p411) target = $region64
        $region63: #{tpu_custom_call.1} parent=47 // pred_region
          %414 = dma.done %s407, 1024
        $region64: #{tpu_custom_call.1} parent=47 // pred_fallthru
          _
        %s415 = sand.u32 %s52, 1
        %s416 = scalar_lea.sflag [#allocation3], %s415
        %s417 = sand.u32 %s52, 1
        %s418 = smul.addr %s417, 8
        %s419 = scalar_lea.vmem [#allocation2], %s418
        %p420 = pneg %p65
        %p421 = pneg %p62
        %s422 = sand.u32 %s30, 1
        %s423 = scalar_lea.sflag [#allocation6], %s422
        %s424 = sand.u32 %s78, 1
        %s425 = smul.addr %s424, 64
        %s426 = scalar_lea.vmem [#allocation5], %s425
        %p427 = pneg %p91
        %p428 = pneg %p88
        %p429 = scmp.lt.s32.totalorder %s34, 1
        %s430 = scalar_select %p429, %s34, 1
        %s431 = scalar_lea.vmem %s2, %s430
        %p432 = pneg %p117
        %p433 = pneg %p114
        %s434 = sand.u32 %s30, 1
        %s435 = scalar_lea.sflag [#allocation6], %s434
        %s436 = sand.u32 %s130, 1
        %s437 = smul.addr %s436, 64
        %s438 = scalar_lea.vmem [#allocation7], %s437
        %p439 = pneg %p143
        %p440 = pneg %p140
        %p441 = scmp.lt.s32.totalorder %s34, 1
        %s442 = scalar_select %p441, %s34, 1
        %s443 = scalar_lea.vmem %s4, %s442
        %p444 = pneg %p169
        %p445 = pneg %p166
        %s446 = sand.u32 %s182, 1
        %s447 = scalar_lea.sflag [#allocation9], %s446
        %s448 = sand.u32 %s182, 1
        %s449 = smul.addr %s448, 64
        %s450 = scalar_lea.vmem [#allocation8], %s449
        %p451 = pneg %p195
        %p452 = pneg %p192
        %p453 = scmp.lt.s32.totalorder %s34, 1
        %s454 = scalar_select %p453, %s34, 1
        %s455 = scalar_lea.vmem %s6, %s454
        %p456 = pneg %p221
        %p457 = pneg %p218
        %p458 = pneg %p249
        %p459 = pneg %p246
        %s460 = sand.u32 %s236, 1
        %s461 = scalar_lea.sflag [#allocation4], %s460
        %s462 = sand.u32 %s236, 1
        %s463 = smul.addr %s462, 8
        %s464 = scalar_lea.vmem [#allocation10], %s463
        %s465 = smul.u32 2, %s35
        %p466 = scmp.lt.s32.totalorder %s34, 1
        %s467 = scalar_select %p466, %s34, 1
        %s468 = scalar_lea.vmem %s2, %s467
        %p469 = scmp.lt.s32.totalorder %s34, 1
        %s470 = scalar_select %p469, %s34, 1
        %s471 = scalar_lea.vmem %s4, %s470
        %p472 = scmp.lt.s32.totalorder %s34, 1
        %s473 = scalar_select %p472, %s34, 1
        %s474 = scalar_lea.vmem %s6, %s473
        %s475 = smul.u32 2, %s35
        %v477 = vld [vmem:[%s383] sm:$0xf]
        %v478 = vld [vmem:[%s383 + $0x4] sm:$0xf]
        %v479 = vld [vmem:[%s392] sm:$0xf]
        %v480 = vld [vmem:[%s392 + $0x4] sm:$0xf]
        %v481 = vld [vmem:[%s392 + $0x8] sm:$0xf]
        %v482 = vld [vmem:[%s392 + $0xc] sm:$0xf]
        %v483 = vld [vmem:[%s392 + $0x10] sm:$0xf]
        %v484 = vld [vmem:[%s392 + $0x14] sm:$0xf]
        %v485 = vld [vmem:[%s392 + $0x18] sm:$0xf]
        %v486 = vld [vmem:[%s392 + $0x1c] sm:$0xf]
        %v487 = vld [vmem:[%s392 + $0x20] sm:$0xf]
        %v488 = vld [vmem:[%s392 + $0x24] sm:$0xf]
        %v489 = vld [vmem:[%s392 + $0x28] sm:$0xf]
        %v490 = vld [vmem:[%s392 + $0x2c] sm:$0xf]
        %v491 = vld [vmem:[%s392 + $0x30] sm:$0xf]
        %v492 = vld [vmem:[%s392 + $0x34] sm:$0xf]
        %v493 = vld [vmem:[%s392 + $0x38] sm:$0xf]
        %v494 = vld [vmem:[%s392 + $0x3c] sm:$0xf]
        %v495 = vld [vmem:[%s468] sm:$0x1]
        %v497 = vlaneseq
        %v498 = vshrl.u32 %v497, 7
        %v499 = vsub.s32 0, %v498
        %v500 = vrot.slane %v495, %v499
        %v504 = vunpack.c.l.b16 %v477
        %v505 = vunpack.c.l.b16 %v478
        %v506 = vpack.c.b16 %v505, %v504
        %v524 = vunpack.c.l.b16 %v479
        %v525 = vunpack.c.l.b16 %v480
        %v526 = vunpack.c.l.b16 %v481
        %v527 = vunpack.c.l.b16 %v482
        %v528 = vunpack.c.l.b16 %v483
        %v529 = vunpack.c.l.b16 %v484
        %v530 = vunpack.c.l.b16 %v485
        %v531 = vunpack.c.l.b16 %v486
        %v532 = vunpack.c.l.b16 %v487
        %v533 = vunpack.c.l.b16 %v488
        %v534 = vunpack.c.l.b16 %v489
        %v535 = vunpack.c.l.b16 %v490
        %v536 = vunpack.c.l.b16 %v491
        %v537 = vunpack.c.l.b16 %v492
        %v538 = vunpack.c.l.b16 %v493
        %v539 = vunpack.c.l.b16 %v494
        %v540 = vpack.c.b16 %v525, %v524
        %v541 = vpack.c.b16 %v527, %v526
        %v542 = vpack.c.b16 %v529, %v528
        %v543 = vpack.c.b16 %v531, %v530
        %v544 = vpack.c.b16 %v533, %v532
        %v545 = vpack.c.b16 %v535, %v534
        %v546 = vpack.c.b16 %v537, %v536
        %v547 = vpack.c.b16 %v539, %v538
        %556 = vmatprep.subr.bf16.mxu0 0
        %557 = vmatpush1.bf16.msra.mxu0 %v540
        %558 = vmatprep.subr.bf16.mxu0 0
        %559 = vmatpush1.bf16.msra.mxu0 %v541
        %560 = vmatprep.subr.bf16.mxu0 0
        %561 = vmatpush1.bf16.msra.mxu0 %v542
        %562 = vmatprep.subr.bf16.mxu0 0
        %563 = vmatpush1.bf16.msra.mxu0 %v543
        %564 = vmatprep.subr.bf16.mxu0 0
        %565 = vmatpush1.bf16.msra.mxu0 %v544
        %566 = vmatprep.subr.bf16.mxu0 0
        %567 = vmatpush1.bf16.msra.mxu0 %v545
        %568 = vmatprep.subr.bf16.mxu0 0
        %569 = vmatpush1.bf16.msra.mxu0 %v546
        %570 = vmatprep.subr.bf16.mxu0 0
        %571 = vmatpush1.bf16.msra.mxu0 %v547
        %572 = vmatprep.subr.bf16.mxu0 0
        %573 = vmatpush1.bf16.msra.mxu0 0
        %574 = vmatprep.subr.bf16.mxu0 0
        %575 = vmatpush1.bf16.msra.mxu0 0
        %576 = vmatprep.subr.bf16.mxu0 0
        %577 = vmatpush1.bf16.msra.mxu0 0
        %578 = vmatprep.subr.bf16.mxu0 0
        %579 = vmatpush1.bf16.msra.mxu0 0
        %580 = vmatprep.subr.bf16.mxu0 0
        %581 = vmatpush1.bf16.msra.mxu0 0
        %582 = vmatprep.subr.bf16.mxu0 0
        %583 = vmatpush1.bf16.msra.mxu0 0
        %584 = vmatprep.subr.bf16.mxu0 0
        %585 = vmatpush1.bf16.msra.mxu0 0
        %586 = vmatprep.subr.bf16.mxu0 0
        %587 = vmatpush1.bf16.msra.mxu0 0
        %588 = vmatprep.mubr.bf16.mxu0 0
        %589 = vmatmul.mubr.bf16.gmra.mrb[0].mxu0 %v506
        %v590 = vpop.f32.mrb[0].mxu0
        %v591 = vadd.f32 %v500, %v590
        %v592 = vpop.f32.mrb[0].mxu0
        %v593 = vpop.f32.mrb[0].mxu0
        %v594 = vadd.f32 %v500, %v593
        %v595 = vpop.f32.mrb[0].mxu0
        %596 = vdwg.mxu0
        %v597 = vmax.f32 %v591, 0.0
        %v598 = vmax.f32 %v594, 0.0
        %v599 = vpack.c.bf16 %v598, %v597
        %v600 = vld [vmem:[%s401] sm:$0xf]
        %v601 = vld [vmem:[%s401 + $0x4] sm:$0xf]
        %v602 = vld [vmem:[%s401 + $0x8] sm:$0xf]
        %v603 = vld [vmem:[%s401 + $0xc] sm:$0xf]
        %v604 = vld [vmem:[%s401 + $0x10] sm:$0xf]
        %v605 = vld [vmem:[%s401 + $0x14] sm:$0xf]
        %v606 = vld [vmem:[%s401 + $0x18] sm:$0xf]
        %v607 = vld [vmem:[%s401 + $0x1c] sm:$0xf]
        %v608 = vld [vmem:[%s401 + $0x20] sm:$0xf]
        %v609 = vld [vmem:[%s401 + $0x24] sm:$0xf]
        %v610 = vld [vmem:[%s401 + $0x28] sm:$0xf]
        %v611 = vld [vmem:[%s401 + $0x2c] sm:$0xf]
        %v612 = vld [vmem:[%s401 + $0x30] sm:$0xf]
        %v613 = vld [vmem:[%s401 + $0x34] sm:$0xf]
        %v614 = vld [vmem:[%s401 + $0x38] sm:$0xf]
        %v615 = vld [vmem:[%s401 + $0x3c] sm:$0xf]
        %v616 = vld [vmem:[%s471] sm:$0x1]
        %v618 = vlaneseq
        %v619 = vshrl.u32 %v618, 7
        %v620 = vsub.s32 0, %v619
        %v621 = vrot.slane %v616, %v620
        %v639 = vunpack.c.l.b16 %v600
        %v640 = vunpack.c.l.b16 %v601
        %v641 = vunpack.c.l.b16 %v602
        %v642 = vunpack.c.l.b16 %v603
        %v643 = vunpack.c.l.b16 %v604
        %v644 = vunpack.c.l.b16 %v605
        %v645 = vunpack.c.l.b16 %v606
        %v646 = vunpack.c.l.b16 %v607
        %v647 = vunpack.c.l.b16 %v608
        %v648 = vunpack.c.l.b16 %v609
        %v649 = vunpack.c.l.b16 %v610
        %v650 = vunpack.c.l.b16 %v611
        %v651 = vunpack.c.l.b16 %v612
        %v652 = vunpack.c.l.b16 %v613
        %v653 = vunpack.c.l.b16 %v614
        %v654 = vunpack.c.l.b16 %v615
        %v655 = vpack.c.b16 %v640, %v639
        %v656 = vpack.c.b16 %v642, %v641
        %v657 = vpack.c.b16 %v644, %v643
        %v658 = vpack.c.b16 %v646, %v645
        %v659 = vpack.c.b16 %v648, %v647
        %v660 = vpack.c.b16 %v650, %v649
        %v661 = vpack.c.b16 %v652, %v651
        %v662 = vpack.c.b16 %v654, %v653
        %671 = vmatprep.subr.bf16.mxu0 0
        %672 = vmatpush1.bf16.msra.mxu0 %v655
        %673 = vmatprep.subr.bf16.mxu0 0
        %674 = vmatpush1.bf16.msra.mxu0 %v656
        %675 = vmatprep.subr.bf16.mxu0 0
        %676 = vmatpush1.bf16.msra.mxu0 %v657
        %677 = vmatprep.subr.bf16.mxu0 0
        %678 = vmatpush1.bf16.msra.mxu0 %v658
        %679 = vmatprep.subr.bf16.mxu0 0
        %680 = vmatpush1.bf16.msra.mxu0 %v659
        %681 = vmatprep.subr.bf16.mxu0 0
        %682 = vmatpush1.bf16.msra.mxu0 %v660
        %683 = vmatprep.subr.bf16.mxu0 0
        %684 = vmatpush1.bf16.msra.mxu0 %v661
        %685 = vmatprep.subr.bf16.mxu0 0
        %686 = vmatpush1.bf16.msra.mxu0 %v662
        %687 = vmatprep.subr.bf16.mxu0 0
        %688 = vmatpush1.bf16.msra.mxu0 0
        %689 = vmatprep.subr.bf16.mxu0 0
        %690 = vmatpush1.bf16.msra.mxu0 0
        %691 = vmatprep.subr.bf16.mxu0 0
        %692 = vmatpush1.bf16.msra.mxu0 0
        %693 = vmatprep.subr.bf16.mxu0 0
        %694 = vmatpush1.bf16.msra.mxu0 0
        %695 = vmatprep.subr.bf16.mxu0 0
        %696 = vmatpush1.bf16.msra.mxu0 0
        %697 = vmatprep.subr.bf16.mxu0 0
        %698 = vmatpush1.bf16.msra.mxu0 0
        %699 = vmatprep.subr.bf16.mxu0 0
        %700 = vmatpush1.bf16.msra.mxu0 0
        %701 = vmatprep.subr.bf16.mxu0 0
        %702 = vmatpush1.bf16.msra.mxu0 0
        %703 = vmatprep.mubr.bf16.mxu0 0
        %704 = vmatmul.mubr.bf16.gmra.mrb[0].mxu0 %v599
        %v705 = vpop.f32.mrb[0].mxu0
        %v706 = vadd.f32 %v621, %v705
        %v707 = vpop.f32.mrb[0].mxu0
        %v708 = vpop.f32.mrb[0].mxu0
        %v709 = vadd.f32 %v621, %v708
        %v710 = vpop.f32.mrb[0].mxu0
        %711 = vdwg.mxu0
        %v712 = vmax.f32 %v706, 0.0
        %v713 = vmax.f32 %v709, 0.0
        %v714 = vpack.c.bf16 %v713, %v712
        %v715 = vld [vmem:[%s410] sm:$0xf]
        %v716 = vld [vmem:[%s410 + $0x4] sm:$0xf]
        %v717 = vld [vmem:[%s410 + $0x8] sm:$0xf]
        %v718 = vld [vmem:[%s410 + $0xc] sm:$0xf]
        %v719 = vld [vmem:[%s410 + $0x10] sm:$0xf]
        %v720 = vld [vmem:[%s410 + $0x14] sm:$0xf]
        %v721 = vld [vmem:[%s410 + $0x18] sm:$0xf]
        %v722 = vld [vmem:[%s410 + $0x1c] sm:$0xf]
        %v723 = vld [vmem:[%s410 + $0x20] sm:$0xf]
        %v724 = vld [vmem:[%s410 + $0x24] sm:$0xf]
        %v725 = vld [vmem:[%s410 + $0x28] sm:$0xf]
        %v726 = vld [vmem:[%s410 + $0x2c] sm:$0xf]
        %v727 = vld [vmem:[%s410 + $0x30] sm:$0xf]
        %v728 = vld [vmem:[%s410 + $0x34] sm:$0xf]
        %v729 = vld [vmem:[%s410 + $0x38] sm:$0xf]
        %v730 = vld [vmem:[%s410 + $0x3c] sm:$0xf]
        %v731 = vld [vmem:[%s474] sm:$0x1]
        %v733 = vlaneseq
        %v734 = vshrl.u32 %v733, 7
        %v735 = vsub.s32 0, %v734
        %v736 = vrot.slane %v731, %v735
        %v754 = vunpack.c.l.b16 %v715
        %v755 = vunpack.c.l.b16 %v716
        %v756 = vunpack.c.l.b16 %v717
        %v757 = vunpack.c.l.b16 %v718
        %v758 = vunpack.c.l.b16 %v719
        %v759 = vunpack.c.l.b16 %v720
        %v760 = vunpack.c.l.b16 %v721
        %v761 = vunpack.c.l.b16 %v722
        %v762 = vunpack.c.l.b16 %v723
        %v763 = vunpack.c.l.b16 %v724
        %v764 = vunpack.c.l.b16 %v725
        %v765 = vunpack.c.l.b16 %v726
        %v766 = vunpack.c.l.b16 %v727
        %v767 = vunpack.c.l.b16 %v728
        %v768 = vunpack.c.l.b16 %v729
        %v769 = vunpack.c.l.b16 %v730
        %v770 = vpack.c.b16 %v755, %v754
        %v771 = vpack.c.b16 %v757, %v756
        %v772 = vpack.c.b16 %v759, %v758
        %v773 = vpack.c.b16 %v761, %v760
        %v774 = vpack.c.b16 %v763, %v762
        %v775 = vpack.c.b16 %v765, %v764
        %v776 = vpack.c.b16 %v767, %v766
        %v777 = vpack.c.b16 %v769, %v768
        %786 = vmatprep.subr.bf16.mxu0 0
        %787 = vmatpush1.bf16.msra.mxu0 %v770
        %788 = vmatprep.subr.bf16.mxu0 0
        %789 = vmatpush1.bf16.msra.mxu0 %v771
        %790 = vmatprep.subr.bf16.mxu0 0
        %791 = vmatpush1.bf16.msra.mxu0 %v772
        %792 = vmatprep.subr.bf16.mxu0 0
        %793 = vmatpush1.bf16.msra.mxu0 %v773
        %794 = vmatprep.subr.bf16.mxu0 0
        %795 = vmatpush1.bf16.msra.mxu0 %v774
        %796 = vmatprep.subr.bf16.mxu0 0
        %797 = vmatpush1.bf16.msra.mxu0 %v775
        %798 = vmatprep.subr.bf16.mxu0 0
        %799 = vmatpush1.bf16.msra.mxu0 %v776
        %800 = vmatprep.subr.bf16.mxu0 0
        %801 = vmatpush1.bf16.msra.mxu0 %v777
        %802 = vmatprep.subr.bf16.mxu0 0
        %803 = vmatpush1.bf16.msra.mxu0 0
        %804 = vmatprep.subr.bf16.mxu0 0
        %805 = vmatpush1.bf16.msra.mxu0 0
        %806 = vmatprep.subr.bf16.mxu0 0
        %807 = vmatpush1.bf16.msra.mxu0 0
        %808 = vmatprep.subr.bf16.mxu0 0
        %809 = vmatpush1.bf16.msra.mxu0 0
        %810 = vmatprep.subr.bf16.mxu0 0
        %811 = vmatpush1.bf16.msra.mxu0 0
        %812 = vmatprep.subr.bf16.mxu0 0
        %813 = vmatpush1.bf16.msra.mxu0 0
        %814 = vmatprep.subr.bf16.mxu0 0
        %815 = vmatpush1.bf16.msra.mxu0 0
        %816 = vmatprep.subr.bf16.mxu0 0
        %817 = vmatpush1.bf16.msra.mxu0 0
        %818 = vmatprep.mubr.bf16.mxu0 0
        %819 = vmatmul.mubr.bf16.gmra.mrb[0].mxu0 %v714
        %v820 = vpop.f32.mrb[0].mxu0
        %v821 = vadd.f32 %v736, %v820
        %v822 = vpop.f32.mrb[0].mxu0
        %v823 = vpop.f32.mrb[0].mxu0
        %v824 = vadd.f32 %v736, %v823
        %v825 = vpop.f32.mrb[0].mxu0
        %826 = vdwg.mxu0
        %v827 = vmul.f32 %v821, %v821
        %v828 = vmul.f32 %v824, %v824
        %829 = vadd.xlane.f32.xlu0 %v827
        %v830 = vpop.xlane.xlu0 %829
        %831 = vadd.xlane.f32.xlu0 %v828
        %v832 = vpop.xlane.xlu0 %831
        %v833 = vmax.f32 %v830, 1e-24
        %v834 = vmax.f32 %v832, 1e-24
        %v835 = vrsqrt.pop %v833
        %v836 = vrsqrt.pop %v834
        %v837 = vmul.f32 %v821, %v835
        %v838 = vmul.f32 %v824, %v836
        %v839 = vpack.c.bf16 %v838, %v837
        %v841 = vunpack.c.l.b16 %v839
        %v842 = vunpack.c.h.b16 %v839
        %v843 = vpack.c.b16 %v841, %v841
        %v844 = vpack.c.b16 %v842, %v842
        %847 = vst [vmem:[%s464] sm:$0xf] %v843
        %848 = vst [vmem:[%s464 + $0x4] sm:$0xf] %v844
        %s849 = sand.u32 %s236, 1
        %s850 = scalar_lea.sflag [#allocation4], %s849
        %s851 = sand.u32 %s236, 1
        %s852 = smul.addr %s851, 8
        %s853 = scalar_lea.vmem [#allocation10], %s852
        // Predicated region
        $region65: #{tpu_custom_call.1} parent=47 // pred_check
          %p854 = pneg %p246
        $region66: #{tpu_custom_call.1} parent=47 // pred_check_branch
          %856 = sbr.rel (%p854) target = $region68
        $region67: #{tpu_custom_call.1} parent=47 // pred_region
          %s857 = smul.u32 2, %s35
          %s859 = ssub.s32 128, 128
          %860 = vsyncadd %s850, %s859
          %s861 = smul.addr %s34, 2
          %s862 = sadd.s32 %s857, %s861
          %s863 = smul.addr %s862, 64
          %s864 = scalar_lea.hbm %s7, %s863
          %s865 = sshll.u32 %s853, 4
          %s866 = int_to_ptr.vmem [resolvable:$true] %s865
          %871 = dma.vmem_to_hbm [thread:$0]  %s866, 128, %s864, %s850, 64, 64, 4
        $region68: #{tpu_custom_call.1} parent=47 // pred_fallthru
          _
      $region48: #{tpu_custom_call.1} parent=5 // pred_fallthru
        _
      %p872 = scmp.le.s32.totalorder 2, %s25
      // Predicated region
      $region69: #{tpu_custom_call.1} parent=5 // pred_check
        %p873 = pneg %p872
      $region70: #{tpu_custom_call.1} parent=5 // pred_check_branch
        %875 = sbr.rel (%p873) target = $region72
      $region71: #{tpu_custom_call.1} parent=5 // pred_region
        %s876 = ssub.s32 %s25, 2
        // Predicated region
        $region73: #{tpu_custom_call.1} parent=71 // pred_check
          %p877 = pneg %p252
        $region74: #{tpu_custom_call.1} parent=71 // pred_check_branch
          %879 = sbr.rel (%p877) target = $region76
        $region75: #{tpu_custom_call.1} parent=71 // pred_region
          %s880 = sand.u32 %s237, 1
          %s881 = scalar_lea.sflag [#allocation4], %s880
          %s882 = sand.u32 %s237, 1
          %s883 = smul.addr %s882, 8
          %s884 = scalar_lea.vmem [#allocation10], %s883
          %885 = dma.done %s881, 128
        $region76: #{tpu_custom_call.1} parent=71 // pred_fallthru
          _
      $region72: #{tpu_custom_call.1} parent=5 // pred_fallthru
        _
    $region6: #{tpu_custom_call.1} parent=1 // loop_footer
      %s29 = sadd.s32 1, %s25
    $region7: #{tpu_custom_call.1} parent=1 // loop_footer_branch
      %24 = sbr.rel target = $region3
    $region8: #{tpu_custom_call.1} parent=1 // loop_exit
      _
    %886 = vsyncpa [#allocation3], 1
    %s887 = scalar_lea.sflag [#allocation3], 1
    %888 = vsyncpa %s887, 1
    %889 = vsyncpa [#allocation6], 1
    %s890 = scalar_lea.sflag [#allocation6], 1
    %891 = vsyncpa %s890, 1
    %892 = vsyncpa [#allocation9], 1
    %s893 = scalar_lea.sflag [#allocation9], 1
    %894 = vsyncpa %s893, 1
    %895 = vsyncpa [#allocation4], 1
    %s896 = scalar_lea.sflag [#allocation4], 1
    %897 = vsyncpa %s896, 1

</llo_original>
